<compile_context>
chip_gen: v7x
topology: tpu7x:2x2x1
jax: 0.10.0
libtpu: 0.0.40
codegen_flags: <defaults>
</compile_context>

<pallas_src>
import jax
import jax.numpy as jnp
import numpy as np
from jax import lax
from jax.experimental import pallas as pl
from jax.experimental.pallas import tpu as pltpu

EPS = 1e-5  # nn.BatchNorm2d default eps
VMEM_LIMIT = 32 * 1024 * 1024  # safe on v5e/v6e/v7x; raises v5e's 16 MiB default


# ----------------------------- Pallas kernels -------------------------------

def _conv_stats_kernel(taps_ref, w_ref, conv_ref, stats_ref):
    """One M tile: folded-tap matmul (bf16 in, f32 acc) + per-channel partial
    sums / sums-of-squares for single-pass batch-norm statistics."""
    conv = jnp.dot(taps_ref[...], w_ref[...],
                   preferred_element_type=jnp.float32)       # (TILE_M, Cout)
    conv_ref[...] = conv
    s = jnp.sum(conv, axis=0, keepdims=True)                  # (1, Cout)
    ss = jnp.sum(conv * conv, axis=0, keepdims=True)          # (1, Cout)
    stats_ref[...] = jnp.concatenate([s, ss], axis=0)[None]   # (1, 2, Cout)


def _bn_relu_kernel(conv_ref, scale_ref, shift_ref, o_ref):
    """y = relu(conv * scale + shift)   (conv1 path, no residual)."""
    y = conv_ref[...] * scale_ref[...] + shift_ref[...]
    o_ref[...] = jnp.maximum(y, 0.0)


def _bn_add_relu_kernel(conv_ref, scale_ref, shift_ref, sc_ref, o_ref):
    """y = relu(conv * scale + shift + shortcut)   (conv2 path)."""
    y = conv_ref[...] * scale_ref[...] + shift_ref[...] + sc_ref[...]
    o_ref[...] = jnp.maximum(y, 0.0)


# ----------------------------- pallas_call wrappers --------------------------

def _pick_tile_m(m, max_tile=1024):
    """Largest power-of-two tile <= max_tile dividing M, preferring >= 2 tiles
    so the parallel axis can shard across TensorCores (v7x)."""
    for t in (1024, 512, 256, 128, 64, 32, 16, 8):
        if t <= max_tile and m % t == 0 and m // t >= 2:
            return t
    return m


def _conv_with_stats(taps, w_folded, tile_m):
    """taps: (M, 9*Cin) bf16, w_folded: (9*Cin, Cout) bf16.
    Returns conv (M, Cout) f32 and per-tile stats (nt, 2, Cout) f32."""
    M, KC = taps.shape
    Cout = w_folded.shape[-1]
    nt = M // tile_m
    return pl.pallas_call(
        _conv_stats_kernel,
        out_shape=(jax.ShapeDtypeStruct((M, Cout), jnp.float32),
                   jax.ShapeDtypeStruct((nt, 2, Cout), jnp.float32)),
        grid_spec=pltpu.PrefetchScalarGridSpec(
            num_scalar_prefetch=0,
            grid=(nt,),
            in_specs=[
                pl.BlockSpec((tile_m, KC), lambda i: (i, 0)),   # tap tile
                pl.BlockSpec((KC, Cout), lambda i: (0, 0)),     # folded weights
            ],
            out_specs=[
                pl.BlockSpec((tile_m, Cout), lambda i: (i, 0)),   # conv tile
                pl.BlockSpec((1, 2, Cout), lambda i: (i, 0, 0)),  # partial stats
            ],
        ),
        compiler_params=pltpu.CompilerParams(
            dimension_semantics=("parallel",),
            vmem_limit_bytes=VMEM_LIMIT),
    )(taps, w_folded)


def _bn_act(conv, scale, shift, shortcut, tile_m):
    """Fused BN-affine (+ optional residual) + ReLU over M tiles."""
    M, Cout = conv.shape
    nt = M // tile_m
    scale2 = scale.reshape(1, Cout).astype(jnp.float32)
    shift2 = shift.reshape(1, Cout).astype(jnp.float32)

    in_specs = [
        pl.BlockSpec((tile_m, Cout), lambda i: (i, 0)),   # conv tile
        pl.BlockSpec((1, Cout), lambda i: (0, 0)),        # scale
        pl.BlockSpec((1, Cout), lambda i: (0, 0)),        # shift
    ]
    args = [conv, scale2, shift2]
    if shortcut is not None:
        kernel = _bn_add_relu_kernel
        in_specs.append(pl.BlockSpec((tile_m, Cout), lambda i: (i, 0)))
        args.append(shortcut.astype(jnp.float32))
    else:
        kernel = _bn_relu_kernel

    return pl.pallas_call(
        kernel,
        out_shape=jax.ShapeDtypeStruct((M, Cout), jnp.float32),
        grid_spec=pltpu.PrefetchScalarGridSpec(
            num_scalar_prefetch=0,
            grid=(nt,),
            in_specs=in_specs,
            out_specs=pl.BlockSpec((tile_m, Cout), lambda i: (i, 0)),
        ),
        compiler_params=pltpu.CompilerParams(
            dimension_semantics=("parallel",),
            vmem_limit_bytes=VMEM_LIMIT),
    )(*args)


# ------------------------------ JAX glue ------------------------------------

def make_taps_folded(x_nhwc, stride):
    """im2col for a 3x3 / pad=1 conv, with the 9 taps folded into the channel
    (contraction) axis: returns (N*Ho*Wo, 9*C)."""
    N, H, W, C = x_nhwc.shape
    Ho = (H + 2 - 3) // stride + 1
    Wo = (W + 2 - 3) // stride + 1
    xp = jnp.pad(x_nhwc, ((0, 0), (1, 1), (1, 1), (0, 0)))
    taps = []
    for kh in range(3):
        for kw in range(3):
            sl = xp[:, kh:kh + stride * (Ho - 1) + 1:stride,
                    kw:kw + stride * (Wo - 1) + 1:stride, :]
            taps.append(sl.reshape(N * Ho * Wo, C))
    # (kh, kw, cin) flatten order matches w.reshape(9*Cin, Cout).
    return jnp.concatenate(taps, axis=-1), (N, Ho, Wo)


def conv_bn_act(x_nhwc, w_hwio, gamma, beta, stride, shortcut=None):
    """conv3x3(stride) -> BatchNorm (batch stats) -> (+shortcut) -> ReLU.
    Returns NHWC output."""
    taps, (N, Ho, Wo) = make_taps_folded(x_nhwc, stride)
    M, KC = taps.shape
    Cout = w_hwio.shape[-1]
    w_folded = w_hwio.reshape(KC, Cout)
    tile_m = _pick_tile_m(M)

    conv, stats = _conv_with_stats(taps.astype(jnp.bfloat16),
                                   w_folded.astype(jnp.bfloat16), tile_m)

    # Tiny (2, Cout) cross-tile reduction + BN scale/shift in plain JAX.
    s = jnp.sum(stats, axis=0)                       # (2, Cout)
    mean = s[0] / M
    var = jnp.maximum(s[1] / M - mean * mean, 0.0)   # biased batch variance
    scale = gamma * lax.rsqrt(var + EPS)
    shift = beta - mean * scale

    out = _bn_act(conv, scale, shift, shortcut, tile_m)   # (M, Cout) f32
    return out.reshape(N, Ho, Wo, Cout)


def basic_block_forward(x_nchw, p, stride, in_planes, planes):
    """Pallas implementation of BasicBlock.forward (NCHW in, NCHW out)."""
    x = jnp.transpose(x_nchw, (0, 2, 3, 1)).astype(jnp.float32)  # NHWC

    # conv1 -> bn1 -> relu (no residual on this path)
    out1 = conv_bn_act(x, p["w1"], p["g1"], p["b1"], stride, shortcut=None)

    # option-A shortcut (stride-2 subsample + zero channel pad) or identity
    N, Ho, Wo, _ = out1.shape
    M = N * Ho * Wo
    if stride != 1 or in_planes != planes:
        pad = planes // 4
        sc = jnp.pad(x[:, ::2, ::2, :], ((0, 0), (0, 0), (0, 0), (pad, pad)))
    else:
        sc = x
    sc = sc.reshape(M, planes)

    # conv2 -> bn2 -> (+ shortcut) -> relu
    out2 = conv_bn_act(out1, p["w2"], p["g2"], p["b2"], 1, shortcut=sc)

    return jnp.transpose(out2, (0, 3, 1, 2))  # NCHW


# --------------------------- pure-JAX reference ------------------------------

def ref_basic_block(x_nchw, p, stride, in_planes, planes):
    def conv(x, w, s):
        return lax.conv_general_dilated(
            x, w, window_strides=(s, s), padding=((1, 1), (1, 1)),
            dimension_numbers=("NCHW", "HWIO", "NCHW"))

    def bn(x, g, b):
        mean = jnp.mean(x, axis=(0, 2, 3), keepdims=True)
        var = jnp.mean((x - mean) ** 2, axis=(0, 2, 3), keepdims=True)
        return ((x - mean) * lax.rsqrt(var + EPS) * g.reshape(1, -1, 1, 1)
                + b.reshape(1, -1, 1, 1))

    out = jax.nn.relu(bn(conv(x_nchw, p["w1"], stride), p["g1"], p["b1"]))
    out = bn(conv(out, p["w2"], 1), p["g2"], p["b2"])
    if stride != 1 or in_planes != planes:
        pad = planes // 4
        sc = jnp.pad(x_nchw[:, :, ::2, ::2],
                     ((0, 0), (pad, pad), (0, 0), (0, 0)))
    else:
        sc = x_nchw
    return jax.nn.relu(out + sc)


# ------------------------------ parameters ----------------------------------

def init_params(key, in_planes, planes):
    k1, k2, k3, k4, k5, k6 = jax.random.split(key, 6)
    w1 = jax.random.normal(k1, (3, 3, in_planes, planes), jnp.float32) \
        * (2.0 / (9 * in_planes)) ** 0.5
    w2 = jax.random.normal(k2, (3, 3, planes, planes), jnp.float32) \
        * (2.0 / (9 * planes)) ** 0.5
    g1 = 1.0 + 0.1 * jax.random.normal(k3, (planes,), jnp.float32)
    b1 = 0.1 * jax.random.normal(k4, (planes,), jnp.float32)
    g2 = 1.0 + 0.1 * jax.random.normal(k5, (planes,), jnp.float32)
    b2 = 0.1 * jax.random.normal(k6, (planes,), jnp.float32)
    return dict(w1=w1, w2=w2, g1=g1, b1=b1, g2=g2, b2=b2)


if __name__ == "__main__":
    key = jax.random.PRNGKey(0)
    kx, kp1, kp2 = jax.random.split(key, 3)
    x = jax.random.normal(kx, (2, 4, 16, 16), jnp.float32)  # NCHW like PyTorch

    # Case 1: identity shortcut (stride=1, in_planes == planes)
    p1 = init_params(kp1, 4, 4)
    y1 = basic_block_forward(x, p1, stride=1, in_planes=4, planes=4)
    jax.block_until_ready(y1)
    r1 = ref_basic_block(x, p1, 1, 4, 4)
    np.testing.assert_allclose(np.asarray(y1), np.asarray(r1),
                               rtol=2e-2, atol=2e-2)

    # Case 2: option-A shortcut (stride=2, spatial subsample + zero-pad chans)
    p2 = init_params(kp2, 4, 8)
    y2 = basic_block_forward(x, p2, stride=2, in_planes=4, planes=8)
    jax.block_until_ready(y2)
    r2 = ref_basic_block(x, p2, 2, 4, 8)
    np.testing.assert_allclose(np.asarray(y2), np.asarray(r2),
                               rtol=2e-2, atol=2e-2)

    print("KERNEL_OK")
</pallas_src>

<mosaic_0001>
module attributes {stable_mosaic.version = 11 : i64} {
  func.func @_conv_stats_kernel(%arg0: i32, %arg1: memref<256x36xbf16, #tpu.memory_space<vmem>>, %arg2: memref<36x4xbf16, #tpu.memory_space<vmem>>, %arg3: memref<256x4xf32, #tpu.memory_space<vmem>>, %arg4: memref<1x2x4xf32, #tpu.memory_space<vmem>>) attributes {dimension_semantics = [#tpu.dimension_semantics<parallel>], iteration_bounds = array<i64: 2>, scalar_prefetch = 0 : i64, scratch_operands = 0 : i64, tpu.core_type = #tpu.core_type<tc>, window_params = [{transform_indices = @transform_0, window_bounds = array<i64: 256, 36>}, {pipeline_mode = #tpu.pipeline_mode<synchronous>, transform_indices = @transform_1, window_bounds = array<i64: 36, 4>}, {transform_indices = @transform_2, window_bounds = array<i64: 256, 4>}, {transform_indices = @transform_3, window_bounds = array<i64: 1, 2, 4>}]} {
    %c0 = arith.constant 0 : index
    %c0_0 = arith.constant 0 : index
    %0 = vector.load %arg1[%c0, %c0_0] : memref<256x36xbf16, #tpu.memory_space<vmem>>, vector<256x36xbf16>
    %c0_1 = arith.constant 0 : index
    %c0_2 = arith.constant 0 : index
    %1 = vector.load %arg2[%c0_1, %c0_2] : memref<36x4xbf16, #tpu.memory_space<vmem>>, vector<36x4xbf16>
    %cst = arith.constant dense<0.000000e+00> : vector<256x4xf32>
    %2 = tpu.matmul %0, %1, %cst {dimension_numbers = #tpu.dot_dimension_numbers<[1], [0], [0], [1], [0, 0, 1, 1], [], []>} : vector<256x36xbf16>, vector<36x4xbf16>, vector<256x4xf32> -> vector<256x4xf32>
    %c0_3 = arith.constant 0 : index
    %c0_4 = arith.constant 0 : index
    %3 = vector.load %arg3[%c0_3, %c0_4] : memref<256x4xf32, #tpu.memory_space<vmem>>, vector<256x4xf32>
    tpu.vector_store %arg3[%c0_3, %c0_4], %2 {strides = array<i32>} : memref<256x4xf32, #tpu.memory_space<vmem>>, vector<256x4xf32>,
    %cst_5 = arith.constant dense<0.000000e+00> : vector<4xf32>
    %4 = vector.multi_reduction <add>, %2, %cst_5 [0] : vector<256x4xf32> to vector<4xf32>
    %5 = vector.shape_cast %4 : vector<4xf32> to vector<1x4xf32>
    %6 = arith.mulf %2, %2 : vector<256x4xf32>
    %cst_6 = arith.constant dense<0.000000e+00> : vector<4xf32>
    %7 = vector.multi_reduction <add>, %6, %cst_6 [0] : vector<256x4xf32> to vector<4xf32>
    %8 = vector.shape_cast %7 : vector<4xf32> to vector<1x4xf32>
    %9 = tpu.concatenate %5, %8 in 0 : vector<1x4xf32>, vector<1x4xf32> -> vector<2x4xf32>
    %10 = vector.shape_cast %9 : vector<2x4xf32> to vector<1x2x4xf32>
    %c0_7 = arith.constant 0 : index
    %c0_8 = arith.constant 0 : index
    %c0_9 = arith.constant 0 : index
    %11 = vector.load %arg4[%c0_7, %c0_8, %c0_9] : memref<1x2x4xf32, #tpu.memory_space<vmem>>, vector<1x2x4xf32>
    tpu.vector_store %arg4[%c0_7, %c0_8, %c0_9], %10 {strides = array<i32>} : memref<1x2x4xf32, #tpu.memory_space<vmem>>, vector<1x2x4xf32>,
    return
  }
  func.func @transform_0(%arg0: i32) -> (i32, i32) {
    %c0_i32 = arith.constant 0 : i32
    %c0_i32_0 = arith.constant 0 : i32
    return %arg0, %c0_i32 : i32, i32
  }
  func.func @transform_1(%arg0: i32) -> (i32, i32) {
    %c0_i32 = arith.constant 0 : i32
    %c0_i32_0 = arith.constant 0 : i32
    %c0_i32_1 = arith.constant 0 : i32
    return %c0_i32, %c0_i32_0 : i32, i32
  }
  func.func @transform_2(%arg0: i32) -> (i32, i32) {
    %c0_i32 = arith.constant 0 : i32
    %c0_i32_0 = arith.constant 0 : i32
    return %arg0, %c0_i32 : i32, i32
  }
  func.func @transform_3(%arg0: i32) -> (i32, i32, i32) {
    %c0_i32 = arith.constant 0 : i32
    %c0_i32_0 = arith.constant 0 : i32
    %c0_i32_1 = arith.constant 0 : i32
    return %arg0, %c0_i32, %c0_i32_0 : i32, i32, i32
  }
}

</mosaic_0001>

<llo_original>
// kernel: tpu_custom_call.1
$region0: #{tpu_custom_call.1}
  #allocation0 [shape = 'u32[]', space=smem, size = 0x4, offset = 0x4, fixed_abs, tag = 'smem constant byte address 0x4 - core index']
  #allocation1 [shape = 'u32[144,128]{1,0:T(1,128)}', space=vmem, size = 0x12000, scoped, tag = 'internal scratch']
  %s0 = inlined_call_operand.vmem [shape: bf16[512,36], index: 0, kind: input, shape index: {}]
  %s1 = inlined_call_operand.vmem [shape: bf16[36,4], index: 1, kind: input, shape index: {}]
  %s2 = inlined_call_operand.vmem [shape: f32[512,4], index: 2, kind: output, shape index: {0}]
  %s3 = inlined_call_operand.hbm [shape: f32[2,2,4], index: 3, kind: output, shape index: {1}]
  %4 = xla_tuple %s2, %s3
  %s5 = sld [smem:[#allocation0]]
  $region49: #{tpu_custom_call.1} parent=0
    _
  %s7 = ssub.s32 1, %s5
  %s8 = scalar_select 0, %s7, %s5
  $region1: #{tpu_custom_call.1} parent=0
    #allocation2 [shape = 'u8[2048]{0}', space=vmem, size = 0x800, scoped, tag = 'output window, operand 1']
    #allocation3 [shape = 's32[2]{0}', space=sflag, size = 0x8, scoped, tag = 'scoped memory for tpu_custom_call.1']
    %9 = vsyncpa [#allocation3], 0
    %s10 = scalar_lea.sflag [#allocation3], 1
    %11 = vsyncpa %s10, 0
    loop: start=0, step=1, limit=4
    $region2: #{tpu_custom_call.1} parent=1 // loop_pre_header
      _
    $region3: #{tpu_custom_call.1} parent=1 // loop_header
      %s13 = sphi 0, %s17
      %p14 = scmp.ge.s32.totalorder %s13, 4
      %s23 = sphi 0, %s25
      %s26 = sphi 0, %s23
      %s27 = sphi 0, %s26
      %s43 = sphi 0, %s27
      %s47 = sphi 0, %s47
      %s49 = sphi 0, %s47
      %s50 = sphi 0, %s49
      %s64 = sphi 0, %s50
      %s70 = sphi 0, %s72
      %s73 = sphi 0, %s70
      %s74 = sphi 0, %s73
      %s90 = sphi 0, %s74
      %s96 = sphi 0, %s98
      %s99 = sphi 0, %s96
      %s100 = sphi 0, %s99
      %s116 = sphi 0, %s100
    $region4: #{tpu_custom_call.1} parent=1 // loop_header_branch
      %16 = sbr.rel (%p14) target = $region8
    $region5: #{tpu_custom_call.1} parent=1 // loop_body
      %s18 = ssub.s32 %s13, 1
      %s19 = ssub.s32 %s13, 2
      %s20 = sadd.s32 %s13, 1
      %s21 = ssub.s32 %s13, %s20
      %p22 = scmp.eq.s32.totalorder %s21, 0
      %s24 = sadd.s32 %s23, 1
      %s25 = scalar_select %p22, %s23, %s24
      %p28 = pneg %p22
      %p29 = scmp.eq.s32.totalorder %s13, 1
      %p30 = por %p28, %p29
      %p31 = scmp.ne.s32.totalorder %s23, %s26
      %p32 = scmp.eq.s32.totalorder %s13, 0
      %p33 = por %p31, %p32
      %p34 = scmp.ne.s32.totalorder %s23, %s26
      %p35 = scmp.eq.s32.totalorder %s18, 1
      %p36 = por %p34, %p35
      %p37 = scmp.ne.s32.totalorder %s26, %s27
      %p38 = scmp.eq.s32.totalorder %s18, 0
      %p39 = por %p37, %p38
      %p40 = scmp.ne.s32.totalorder %s26, %s27
      %p41 = scmp.eq.s32.totalorder %s19, 1
      %p42 = por %p40, %p41
      %p44 = scmp.ne.s32.totalorder %s27, %s43
      %p45 = scmp.eq.s32.totalorder %s19, 0
      %p46 = por %p44, %p45
      %s48 = sadd.s32 %s47, 1
      %p51 = scmp.eq.s32.totalorder %s13, 1
      %p52 = scmp.ne.s32.totalorder %s47, %s49
      %p53 = scmp.eq.s32.totalorder %s13, 0
      %p54 = por %p52, %p53
      %p55 = scmp.ne.s32.totalorder %s47, %s49
      %p56 = scmp.eq.s32.totalorder %s18, 1
      %p57 = por %p55, %p56
      %p58 = scmp.ne.s32.totalorder %s49, %s50
      %p59 = scmp.eq.s32.totalorder %s18, 0
      %p60 = por %p58, %p59
      %p61 = scmp.ne.s32.totalorder %s49, %s50
      %p62 = scmp.eq.s32.totalorder %s19, 1
      %p63 = por %p61, %p62
      %p65 = scmp.ne.s32.totalorder %s50, %s64
      %p66 = scmp.eq.s32.totalorder %s19, 0
      %p67 = por %p65, %p66
      %s68 = ssub.s32 %s13, %s20
      %p69 = scmp.eq.s32.totalorder %s68, 0
      %s71 = sadd.s32 %s70, 1
      %s72 = scalar_select %p69, %s70, %s71
      %p75 = pneg %p69
      %p76 = scmp.eq.s32.totalorder %s13, 1
      %p77 = por %p75, %p76
      %p78 = scmp.ne.s32.totalorder %s70, %s73
      %p79 = scmp.eq.s32.totalorder %s13, 0
      %p80 = por %p78, %p79
      %p81 = scmp.ne.s32.totalorder %s70, %s73
      %p82 = scmp.eq.s32.totalorder %s18, 1
      %p83 = por %p81, %p82
      %p84 = scmp.ne.s32.totalorder %s73, %s74
      %p85 = scmp.eq.s32.totalorder %s18, 0
      %p86 = por %p84, %p85
      %p87 = scmp.ne.s32.totalorder %s73, %s74
      %p88 = scmp.eq.s32.totalorder %s19, 1
      %p89 = por %p87, %p88
      %p91 = scmp.ne.s32.totalorder %s74, %s90
      %p92 = scmp.eq.s32.totalorder %s19, 0
      %p93 = por %p91, %p92
      %s94 = ssub.s32 %s13, %s20
      %p95 = scmp.eq.s32.totalorder %s94, 0
      %s97 = sadd.s32 %s96, 1
      %s98 = scalar_select %p95, %s96, %s97
      %p101 = pneg %p95
      %p102 = scmp.eq.s32.totalorder %s13, 1
      %p103 = por %p101, %p102
      %p104 = scmp.ne.s32.totalorder %s96, %s99
      %p105 = scmp.eq.s32.totalorder %s13, 0
      %p106 = por %p104, %p105
      %p107 = scmp.ne.s32.totalorder %s96, %s99
      %p108 = scmp.eq.s32.totalorder %s18, 1
      %p109 = por %p107, %p108
      %p110 = scmp.ne.s32.totalorder %s99, %s100
      %p111 = scmp.eq.s32.totalorder %s18, 0
      %p112 = por %p110, %p111
      %p113 = scmp.ne.s32.totalorder %s99, %s100
      %p114 = scmp.eq.s32.totalorder %s19, 1
      %p115 = por %p113, %p114
      %p117 = scmp.ne.s32.totalorder %s100, %s116
      %p118 = scmp.eq.s32.totalorder %s19, 0
      %p119 = por %p117, %p118
      %p120 = scmp.le.s32.totalorder 1, %s13
      %p121 = scmp.lt.s32.totalorder %s13, 3
      %p122 = pnand %p120, %p121
      %p123 = pneg %p122
      // Predicated region
      $region9: #{tpu_custom_call.1} parent=5 // pred_check
        _
      $region10: #{tpu_custom_call.1} parent=5 // pred_check_branch
        %125 = sbr.rel (%p122) target = $region12
      $region11: #{tpu_custom_call.1} parent=5 // pred_region
        %s126 = ssub.s32 %s13, 1
        // Predicated region
        $region13: #{tpu_custom_call.1} parent=11 // pred_check
          %p127 = pneg %p60
        $region14: #{tpu_custom_call.1} parent=11 // pred_check_branch
          %129 = sbr.rel (%p127) target = $region16
        $region15: #{tpu_custom_call.1} parent=11 // pred_region
          _
        $region16: #{tpu_custom_call.1} parent=11 // pred_fallthru
          _
      $region12: #{tpu_custom_call.1} parent=5 // pred_fallthru
        _
      %p130 = scmp.lt.s32.totalorder %s13, 2
      // Predicated region
      $region17: #{tpu_custom_call.1} parent=5 // pred_check
        %p131 = pneg %p130
      $region18: #{tpu_custom_call.1} parent=5 // pred_check_branch
        %133 = sbr.rel (%p131) target = $region20
      $region19: #{tpu_custom_call.1} parent=5 // pred_region
        // Predicated region
        $region21: #{tpu_custom_call.1} parent=19 // pred_check
          %p134 = pneg %p33
        $region22: #{tpu_custom_call.1} parent=19 // pred_check_branch
          %136 = sbr.rel (%p134) target = $region24
        $region23: #{tpu_custom_call.1} parent=19 // pred_region
          %s137 = smul.u32 32, %s13
          %p138 = scmp.lt.s32.totalorder %s137, 63
          %s139 = scalar_select %p138, %s137, 63
          %s140 = smul.addr %s139, 4
          %s141 = scalar_lea.vmem %s0, %s140
          %s142 = smul.u32 32, %s13
        $region24: #{tpu_custom_call.1} parent=19 // pred_fallthru
          _
      $region20: #{tpu_custom_call.1} parent=5 // pred_fallthru
        _
      %p143 = scmp.le.s32.totalorder 1, %s13
      %p144 = scmp.lt.s32.totalorder %s13, 3
      %p145 = pnand %p143, %p144
      %p146 = pneg %p145
      // Predicated region
      $region25: #{tpu_custom_call.1} parent=5 // pred_check
        _
      $region26: #{tpu_custom_call.1} parent=5 // pred_check_branch
        %148 = sbr.rel (%p145) target = $region28
      $region27: #{tpu_custom_call.1} parent=5 // pred_region
        %s149 = ssub.s32 %s13, 1
        %s150 = smul.u32 32, %s18
        %p151 = scmp.lt.s32.totalorder %s150, 63
        %s152 = scalar_select %p151, %s150, 63
        %s153 = smul.addr %s152, 4
        %s154 = scalar_lea.vmem %s0, %s153
        %p155 = pneg %p39
        %p156 = pneg %p36
        %p157 = pneg %p60
        %p158 = pneg %p57
        %p159 = pneg %p86
        %p160 = pneg %p83
        %s161 = smul.u32 32, %s18
        %p162 = scmp.lt.s32.totalorder %s161, 63
        %s163 = scalar_select %p162, %s161, 63
        %s164 = smul.addr %s163, 8
        %s165 = scalar_lea.vmem %s2, %s164
        %p166 = pneg %p112
        %p167 = pneg %p109
        %s168 = sand.u32 %s99, 1
        %s169 = scalar_lea.sflag [#allocation3], %s168
        %s170 = sand.u32 %s99, 1
        %s171 = smul.addr %s170, 2
        %s172 = scalar_lea.vmem [#allocation2], %s171
        %s173 = smul.u32 32, %s18
        %p174 = scmp.lt.s32.totalorder %s173, 63
        %s175 = scalar_select %p174, %s173, 63
        %s176 = smul.addr %s175, 4
        %s177 = scalar_lea.vmem %s0, %s176
        %s178 = smul.u32 32, %s18
        %s179 = smul.u32 32, %s18
        %p180 = scmp.lt.s32.totalorder %s179, 63
        %s181 = scalar_select %p180, %s179, 63
        %s182 = smul.addr %s181, 8
        %s183 = scalar_lea.vmem %s2, %s182
        %s184 = smul.u32 32, %s18
        %v186 = vld [vmem:[%s177] sm:$0xf]
        %v187 = vld [vmem:[%s177 + $0x4] sm:$0xf]
        %v188 = vld [vmem:[%s177 + $0x8] sm:$0xf]
        %v189 = vld [vmem:[%s177 + $0xc] sm:$0xf]
        %v190 = vld [vmem:[%s177 + $0x10] sm:$0xf]
        %v191 = vld [vmem:[%s177 + $0x14] sm:$0xf]
        %v192 = vld [vmem:[%s177 + $0x18] sm:$0xf]
        %v193 = vld [vmem:[%s177 + $0x1c] sm:$0xf]
        %v194 = vld [vmem:[%s177 + $0x20] sm:$0xf]
        %v195 = vld [vmem:[%s177 + $0x24] sm:$0xf]
        %v196 = vld [vmem:[%s177 + $0x28] sm:$0xf]
        %v197 = vld [vmem:[%s177 + $0x2c] sm:$0xf]
        %v198 = vld [vmem:[%s177 + $0x30] sm:$0xf]
        %v199 = vld [vmem:[%s177 + $0x34] sm:$0xf]
        %v200 = vld [vmem:[%s177 + $0x38] sm:$0xf]
        %v201 = vld [vmem:[%s177 + $0x3c] sm:$0xf]
        %v202 = vld [vmem:[%s177 + $0x40] sm:$0xf]
        %v203 = vld [vmem:[%s177 + $0x44] sm:$0xf]
        %v204 = vld [vmem:[%s177 + $0x48] sm:$0xf]
        %v205 = vld [vmem:[%s177 + $0x4c] sm:$0xf]
        %v206 = vld [vmem:[%s177 + $0x50] sm:$0xf]
        %v207 = vld [vmem:[%s177 + $0x54] sm:$0xf]
        %v208 = vld [vmem:[%s177 + $0x58] sm:$0xf]
        %v209 = vld [vmem:[%s177 + $0x5c] sm:$0xf]
        %v210 = vld [vmem:[%s177 + $0x60] sm:$0xf]
        %v211 = vld [vmem:[%s177 + $0x64] sm:$0xf]
        %v212 = vld [vmem:[%s177 + $0x68] sm:$0xf]
        %v213 = vld [vmem:[%s177 + $0x6c] sm:$0xf]
        %v214 = vld [vmem:[%s177 + $0x70] sm:$0xf]
        %v215 = vld [vmem:[%s177 + $0x74] sm:$0xf]
        %v216 = vld [vmem:[%s177 + $0x78] sm:$0xf]
        %v217 = vld [vmem:[%s177 + $0x7c] sm:$0xf]
        %v218 = vld [vmem:[%s1] sm:$0xf]
        %v219 = vld [vmem:[%s1 + $0x4] sm:$0xf]
        %v220 = vld [vmem:[%s1 + $0x8] sm:$0xf]
        %v221 = vld [vmem:[%s1 + $0xc] sm:$0xf]
        %v222 = vld [vmem:[%s1 + $0x10] sm:$0x3]
        %v255 = vunpack.c.l.b16 %v186
        %v256 = vunpack.c.l.b16 %v187
        %v257 = vunpack.c.l.b16 %v188
        %v258 = vunpack.c.l.b16 %v189
        %v259 = vunpack.c.l.b16 %v190
        %v260 = vunpack.c.l.b16 %v191
        %v261 = vunpack.c.l.b16 %v192
        %v262 = vunpack.c.l.b16 %v193
        %v263 = vunpack.c.l.b16 %v194
        %v264 = vunpack.c.l.b16 %v195
        %v265 = vunpack.c.l.b16 %v196
        %v266 = vunpack.c.l.b16 %v197
        %v267 = vunpack.c.l.b16 %v198
        %v268 = vunpack.c.l.b16 %v199
        %v269 = vunpack.c.l.b16 %v200
        %v270 = vunpack.c.l.b16 %v201
        %v271 = vunpack.c.l.b16 %v202
        %v272 = vunpack.c.l.b16 %v203
        %v273 = vunpack.c.l.b16 %v204
        %v274 = vunpack.c.l.b16 %v205
        %v275 = vunpack.c.l.b16 %v206
        %v276 = vunpack.c.l.b16 %v207
        %v277 = vunpack.c.l.b16 %v208
        %v278 = vunpack.c.l.b16 %v209
        %v279 = vunpack.c.l.b16 %v210
        %v280 = vunpack.c.l.b16 %v211
        %v281 = vunpack.c.l.b16 %v212
        %v282 = vunpack.c.l.b16 %v213
        %v283 = vunpack.c.l.b16 %v214
        %v284 = vunpack.c.l.b16 %v215
        %v285 = vunpack.c.l.b16 %v216
        %v286 = vunpack.c.l.b16 %v217
        %v287 = vpack.c.b16 %v256, %v255
        %v288 = vpack.c.b16 %v258, %v257
        %v289 = vpack.c.b16 %v260, %v259
        %v290 = vpack.c.b16 %v262, %v261
        %v291 = vpack.c.b16 %v264, %v263
        %v292 = vpack.c.b16 %v266, %v265
        %v293 = vpack.c.b16 %v268, %v267
        %v294 = vpack.c.b16 %v270, %v269
        %v295 = vpack.c.b16 %v272, %v271
        %v296 = vpack.c.b16 %v274, %v273
        %v297 = vpack.c.b16 %v276, %v275
        %v298 = vpack.c.b16 %v278, %v277
        %v299 = vpack.c.b16 %v280, %v279
        %v300 = vpack.c.b16 %v282, %v281
        %v301 = vpack.c.b16 %v284, %v283
        %v302 = vpack.c.b16 %v286, %v285
        %v308 = vunpack.c.l.b16 %v218
        %v309 = vunpack.c.l.b16 %v219
        %v310 = vunpack.c.l.b16 %v220
        %v311 = vunpack.c.l.b16 %v221
        %v312 = vunpack.c.l.b16 %v222
        %v313 = vpack.c.b16 %v309, %v308
        %v314 = vpack.c.b16 %v311, %v310
        %v315 = vpack.c.b16 %v312, %v312
        %vm318 = vcmask 293888
        %v320 = vsel %vm318, %v287, 0
        %v323 = vsel %vm318, %v288, 0
        %v326 = vsel %vm318, %v289, 0
        %v329 = vsel %vm318, %v290, 0
        %v332 = vsel %vm318, %v291, 0
        %v335 = vsel %vm318, %v292, 0
        %v338 = vsel %vm318, %v293, 0
        %v341 = vsel %vm318, %v294, 0
        %v344 = vsel %vm318, %v295, 0
        %v347 = vsel %vm318, %v296, 0
        %v350 = vsel %vm318, %v297, 0
        %v353 = vsel %vm318, %v298, 0
        %v356 = vsel %vm318, %v299, 0
        %v359 = vsel %vm318, %v300, 0
        %v362 = vsel %vm318, %v301, 0
        %v365 = vsel %vm318, %v302, 0
        %vm367 = vcmask 1041408
        %v369 = vsel %vm367, %v315, 0
        %371 = vmatprep.subr.bf16.mxu0 0
        %372 = vmatpush1.bf16.msra.mxu0 %v313
        %373 = vmatprep.subr.bf16.mxu0 0
        %374 = vmatpush1.bf16.msra.mxu0 %v314
        %375 = vmatprep.subr.bf16.mxu0 0
        %376 = vmatpush1.bf16.msra.mxu0 %v369
        %377 = vmatprep.subr.bf16.mxu0 0
        %378 = vmatpush1.bf16.msra.mxu0 0
        %379 = vmatprep.subr.bf16.mxu0 0
        %380 = vmatpush1.bf16.msra.mxu0 0
        %381 = vmatprep.subr.bf16.mxu0 0
        %382 = vmatpush1.bf16.msra.mxu0 0
        %383 = vmatprep.subr.bf16.mxu0 0
        %384 = vmatpush1.bf16.msra.mxu0 0
        %385 = vmatprep.subr.bf16.mxu0 0
        %386 = vmatpush1.bf16.msra.mxu0 0
        %387 = vmatprep.subr.bf16.mxu0 0
        %388 = vmatpush1.bf16.msra.mxu0 0
        %389 = vmatprep.subr.bf16.mxu0 0
        %390 = vmatpush1.bf16.msra.mxu0 0
        %391 = vmatprep.subr.bf16.mxu0 0
        %392 = vmatpush1.bf16.msra.mxu0 0
        %393 = vmatprep.subr.bf16.mxu0 0
        %394 = vmatpush1.bf16.msra.mxu0 0
        %395 = vmatprep.subr.bf16.mxu0 0
        %396 = vmatpush1.bf16.msra.mxu0 0
        %397 = vmatprep.subr.bf16.mxu0 0
        %398 = vmatpush1.bf16.msra.mxu0 0
        %399 = vmatprep.subr.bf16.mxu0 0
        %400 = vmatpush1.bf16.msra.mxu0 0
        %401 = vmatprep.subr.bf16.mxu0 0
        %402 = vmatpush1.bf16.msra.mxu0 0
        %403 = vmatprep.mubr.bf16.mxu0 0
        %404 = vmatmul.mubr.bf16.gmra.mrb[0].mxu0 %v320
        %v405 = vpop.f32.mrb[0].mxu0
        %v406 = vadd.f32 0.0, %v405
        %v407 = vpop.f32.mrb[0].mxu0
        %v408 = vpop.f32.mrb[0].mxu0
        %v409 = vadd.f32 0.0, %v408
        %v410 = vpop.f32.mrb[0].mxu0
        %411 = vmatprep.mubr.bf16.mxu0 0
        %412 = vmatmul.mubr.bf16.gmra.mrb[0].mxu0 %v323
        %v413 = vpop.f32.mrb[0].mxu0
        %v414 = vadd.f32 0.0, %v413
        %v415 = vpop.f32.mrb[0].mxu0
        %v416 = vpop.f32.mrb[0].mxu0
        %v417 = vadd.f32 0.0, %v416
        %v418 = vpop.f32.mrb[0].mxu0
        %419 = vmatprep.mubr.bf16.mxu0 0
        %420 = vmatmul.mubr.bf16.gmra.mrb[0].mxu0 %v326
        %v421 = vpop.f32.mrb[0].mxu0
        %v422 = vadd.f32 0.0, %v421
        %v423 = vpop.f32.mrb[0].mxu0
        %v424 = vpop.f32.mrb[0].mxu0
        %v425 = vadd.f32 0.0, %v424
        %v426 = vpop.f32.mrb[0].mxu0
        %427 = vmatprep.mubr.bf16.mxu0 0
        %428 = vmatmul.mubr.bf16.gmra.mrb[0].mxu0 %v329
        %v429 = vpop.f32.mrb[0].mxu0
        %v430 = vadd.f32 0.0, %v429
        %v431 = vpop.f32.mrb[0].mxu0
        %v432 = vpop.f32.mrb[0].mxu0
        %v433 = vadd.f32 0.0, %v432
        %v434 = vpop.f32.mrb[0].mxu0
        %435 = vmatprep.mubr.bf16.mxu0 0
        %436 = vmatmul.mubr.bf16.gmra.mrb[0].mxu0 %v332
        %v437 = vpop.f32.mrb[0].mxu0
        %v438 = vadd.f32 0.0, %v437
        %v439 = vpop.f32.mrb[0].mxu0
        %v440 = vpop.f32.mrb[0].mxu0
        %v441 = vadd.f32 0.0, %v440
        %v442 = vpop.f32.mrb[0].mxu0
        %443 = vmatprep.mubr.bf16.mxu0 0
        %444 = vmatmul.mubr.bf16.gmra.mrb[0].mxu0 %v335
        %v445 = vpop.f32.mrb[0].mxu0
        %v446 = vadd.f32 0.0, %v445
        %v447 = vpop.f32.mrb[0].mxu0
        %v448 = vpop.f32.mrb[0].mxu0
        %v449 = vadd.f32 0.0, %v448
        %v450 = vpop.f32.mrb[0].mxu0
        %451 = vmatprep.mubr.bf16.mxu0 0
        %452 = vmatmul.mubr.bf16.gmra.mrb[0].mxu0 %v338
        %v453 = vpop.f32.mrb[0].mxu0
        %v454 = vadd.f32 0.0, %v453
        %v455 = vpop.f32.mrb[0].mxu0
        %v456 = vpop.f32.mrb[0].mxu0
        %v457 = vadd.f32 0.0, %v456
        %v458 = vpop.f32.mrb[0].mxu0
        %459 = vmatprep.mubr.bf16.mxu0 0
        %460 = vmatmul.mubr.bf16.gmra.mrb[0].mxu0 %v341
        %v461 = vpop.f32.mrb[0].mxu0
        %v462 = vadd.f32 0.0, %v461
        %v463 = vpop.f32.mrb[0].mxu0
        %v464 = vpop.f32.mrb[0].mxu0
        %v465 = vadd.f32 0.0, %v464
        %v466 = vpop.f32.mrb[0].mxu0
        %467 = vmatprep.mubr.bf16.mxu0 0
        %468 = vmatmul.mubr.bf16.gmra.mrb[0].mxu0 %v344
        %v469 = vpop.f32.mrb[0].mxu0
        %v470 = vadd.f32 0.0, %v469
        %v471 = vpop.f32.mrb[0].mxu0
        %v472 = vpop.f32.mrb[0].mxu0
        %v473 = vadd.f32 0.0, %v472
        %v474 = vpop.f32.mrb[0].mxu0
        %475 = vmatprep.mubr.bf16.mxu0 0
        %476 = vmatmul.mubr.bf16.gmra.mrb[0].mxu0 %v347
        %v477 = vpop.f32.mrb[0].mxu0
        %v478 = vadd.f32 0.0, %v477
        %v479 = vpop.f32.mrb[0].mxu0
        %v480 = vpop.f32.mrb[0].mxu0
        %v481 = vadd.f32 0.0, %v480
        %v482 = vpop.f32.mrb[0].mxu0
        %483 = vmatprep.mubr.bf16.mxu0 0
        %484 = vmatmul.mubr.bf16.gmra.mrb[0].mxu0 %v350
        %v485 = vpop.f32.mrb[0].mxu0
        %v486 = vadd.f32 0.0, %v485
        %v487 = vpop.f32.mrb[0].mxu0
        %v488 = vpop.f32.mrb[0].mxu0
        %v489 = vadd.f32 0.0, %v488
        %v490 = vpop.f32.mrb[0].mxu0
        %491 = vmatprep.mubr.bf16.mxu0 0
        %492 = vmatmul.mubr.bf16.gmra.mrb[0].mxu0 %v353
        %v493 = vpop.f32.mrb[0].mxu0
        %v494 = vadd.f32 0.0, %v493
        %v495 = vpop.f32.mrb[0].mxu0
        %v496 = vpop.f32.mrb[0].mxu0
        %v497 = vadd.f32 0.0, %v496
        %v498 = vpop.f32.mrb[0].mxu0
        %499 = vmatprep.mubr.bf16.mxu0 0
        %500 = vmatmul.mubr.bf16.gmra.mrb[0].mxu0 %v356
        %v501 = vpop.f32.mrb[0].mxu0
        %v502 = vadd.f32 0.0, %v501
        %v503 = vpop.f32.mrb[0].mxu0
        %v504 = vpop.f32.mrb[0].mxu0
        %v505 = vadd.f32 0.0, %v504
        %v506 = vpop.f32.mrb[0].mxu0
        %507 = vmatprep.mubr.bf16.mxu0 0
        %508 = vmatmul.mubr.bf16.gmra.mrb[0].mxu0 %v359
        %v509 = vpop.f32.mrb[0].mxu0
        %v510 = vadd.f32 0.0, %v509
        %v511 = vpop.f32.mrb[0].mxu0
        %v512 = vpop.f32.mrb[0].mxu0
        %v513 = vadd.f32 0.0, %v512
        %v514 = vpop.f32.mrb[0].mxu0
        %515 = vmatprep.mubr.bf16.mxu0 0
        %516 = vmatmul.mubr.bf16.gmra.mrb[0].mxu0 %v362
        %v517 = vpop.f32.mrb[0].mxu0
        %v518 = vadd.f32 0.0, %v517
        %v519 = vpop.f32.mrb[0].mxu0
        %v520 = vpop.f32.mrb[0].mxu0
        %v521 = vadd.f32 0.0, %v520
        %v522 = vpop.f32.mrb[0].mxu0
        %523 = vmatprep.mubr.bf16.mxu0 0
        %524 = vmatmul.mubr.bf16.gmra.mrb[0].mxu0 %v365
        %v525 = vpop.f32.mrb[0].mxu0
        %v526 = vadd.f32 0.0, %v525
        %v527 = vpop.f32.mrb[0].mxu0
        %v528 = vpop.f32.mrb[0].mxu0
        %v529 = vadd.f32 0.0, %v528
        %v530 = vpop.f32.mrb[0].mxu0
        %531 = vdwg.mxu0
        %vm532 = vcmask 31744
        %533 = vst.msk [vmem:[%s183] sm:$0xff] %vm532, %v406
        %534 = vst.msk [vmem:[%s183 + $0x8] sm:$0xff] %vm532, %v409
        %535 = vst.msk [vmem:[%s183 + $0x10] sm:$0xff] %vm532, %v414
        %536 = vst.msk [vmem:[%s183 + $0x18] sm:$0xff] %vm532, %v417
        %537 = vst.msk [vmem:[%s183 + $0x20] sm:$0xff] %vm532, %v422
        %538 = vst.msk [vmem:[%s183 + $0x28] sm:$0xff] %vm532, %v425
        %539 = vst.msk [vmem:[%s183 + $0x30] sm:$0xff] %vm532, %v430
        %540 = vst.msk [vmem:[%s183 + $0x38] sm:$0xff] %vm532, %v433
        %541 = vst.msk [vmem:[%s183 + $0x40] sm:$0xff] %vm532, %v438
        %542 = vst.msk [vmem:[%s183 + $0x48] sm:$0xff] %vm532, %v441
        %543 = vst.msk [vmem:[%s183 + $0x50] sm:$0xff] %vm532, %v446
        %544 = vst.msk [vmem:[%s183 + $0x58] sm:$0xff] %vm532, %v449
        %545 = vst.msk [vmem:[%s183 + $0x60] sm:$0xff] %vm532, %v454
        %546 = vst.msk [vmem:[%s183 + $0x68] sm:$0xff] %vm532, %v457
        %547 = vst.msk [vmem:[%s183 + $0x70] sm:$0xff] %vm532, %v462
        %548 = vst.msk [vmem:[%s183 + $0x78] sm:$0xff] %vm532, %v465
        %549 = vst.msk [vmem:[%s183 + $0x80] sm:$0xff] %vm532, %v470
        %550 = vst.msk [vmem:[%s183 + $0x88] sm:$0xff] %vm532, %v473
        %551 = vst.msk [vmem:[%s183 + $0x90] sm:$0xff] %vm532, %v478
        %552 = vst.msk [vmem:[%s183 + $0x98] sm:$0xff] %vm532, %v481
        %553 = vst.msk [vmem:[%s183 + $0xa0] sm:$0xff] %vm532, %v486
        %554 = vst.msk [vmem:[%s183 + $0xa8] sm:$0xff] %vm532, %v489
        %555 = vst.msk [vmem:[%s183 + $0xb0] sm:$0xff] %vm532, %v494
        %556 = vst.msk [vmem:[%s183 + $0xb8] sm:$0xff] %vm532, %v497
        %557 = vst.msk [vmem:[%s183 + $0xc0] sm:$0xff] %vm532, %v502
        %558 = vst.msk [vmem:[%s183 + $0xc8] sm:$0xff] %vm532, %v505
        %559 = vst.msk [vmem:[%s183 + $0xd0] sm:$0xff] %vm532, %v510
        %560 = vst.msk [vmem:[%s183 + $0xd8] sm:$0xff] %vm532, %v513
        %561 = vst.msk [vmem:[%s183 + $0xe0] sm:$0xff] %vm532, %v518
        %562 = vst.msk [vmem:[%s183 + $0xe8] sm:$0xff] %vm532, %v521
        %563 = vst.msk [vmem:[%s183 + $0xf0] sm:$0xff] %vm532, %v526
        %564 = vst.msk [vmem:[%s183 + $0xf8] sm:$0xff] %vm532, %v529
        %v565 = vsel %vm532, %v406, 0.0
        %v566 = vsel %vm532, %v409, 0.0
        %v567 = vadd.f32 %v565, %v566
        %v568 = vsel %vm532, %v414, 0.0
        %v569 = vadd.f32 %v567, %v568
        %v570 = vsel %vm532, %v417, 0.0
        %v571 = vadd.f32 %v569, %v570
        %v572 = vsel %vm532, %v422, 0.0
        %v573 = vadd.f32 %v571, %v572
        %v574 = vsel %vm532, %v425, 0.0
        %v575 = vadd.f32 %v573, %v574
        %v576 = vsel %vm532, %v430, 0.0
        %v577 = vadd.f32 %v575, %v576
        %v578 = vsel %vm532, %v433, 0.0
        %v579 = vadd.f32 %v577, %v578
        %v580 = vsel %vm532, %v438, 0.0
        %v581 = vadd.f32 %v579, %v580
        %v582 = vsel %vm532, %v441, 0.0
        %v583 = vadd.f32 %v581, %v582
        %v584 = vsel %vm532, %v446, 0.0
        %v585 = vadd.f32 %v583, %v584
        %v586 = vsel %vm532, %v449, 0.0
        %v587 = vadd.f32 %v585, %v586
        %v588 = vsel %vm532, %v454, 0.0
        %v589 = vadd.f32 %v587, %v588
        %v590 = vsel %vm532, %v457, 0.0
        %v591 = vadd.f32 %v589, %v590
        %v592 = vsel %vm532, %v462, 0.0
        %v593 = vadd.f32 %v591, %v592
        %v594 = vsel %vm532, %v465, 0.0
        %v595 = vadd.f32 %v593, %v594
        %v596 = vsel %vm532, %v470, 0.0
        %v597 = vadd.f32 %v595, %v596
        %v598 = vsel %vm532, %v473, 0.0
        %v599 = vadd.f32 %v597, %v598
        %v600 = vsel %vm532, %v478, 0.0
        %v601 = vadd.f32 %v599, %v600
        %v602 = vsel %vm532, %v481, 0.0
        %v603 = vadd.f32 %v601, %v602
        %v604 = vsel %vm532, %v486, 0.0
        %v605 = vadd.f32 %v603, %v604
        %v606 = vsel %vm532, %v489, 0.0
        %v607 = vadd.f32 %v605, %v606
        %v608 = vsel %vm532, %v494, 0.0
        %v609 = vadd.f32 %v607, %v608
        %v610 = vsel %vm532, %v497, 0.0
        %v611 = vadd.f32 %v609, %v610
        %v612 = vsel %vm532, %v502, 0.0
        %v613 = vadd.f32 %v611, %v612
        %v614 = vsel %vm532, %v505, 0.0
        %v615 = vadd.f32 %v613, %v614
        %v616 = vsel %vm532, %v510, 0.0
        %v617 = vadd.f32 %v615, %v616
        %v618 = vsel %vm532, %v513, 0.0
        %v619 = vadd.f32 %v617, %v618
        %v620 = vsel %vm532, %v518, 0.0
        %v621 = vadd.f32 %v619, %v620
        %v622 = vsel %vm532, %v521, 0.0
        %v623 = vadd.f32 %v621, %v622
        %v624 = vsel %vm532, %v526, 0.0
        %v625 = vadd.f32 %v623, %v624
        %v626 = vsel %vm532, %v529, 0.0
        %v627 = vadd.f32 %v625, %v626
        %v628 = vrot.slane %v627, 4
        %v629 = vadd.f32 %v627, %v628
        %v630 = vrot.slane %v629, 2
        %v631 = vadd.f32 %v629, %v630
        %v632 = vrot.slane %v631, 1
        %v633 = vadd.f32 %v631, %v632
        %v634 = vmul.f32 %v406, %v406
        %v635 = vmul.f32 %v409, %v409
        %v636 = vmul.f32 %v414, %v414
        %v637 = vmul.f32 %v417, %v417
        %v638 = vmul.f32 %v422, %v422
        %v639 = vmul.f32 %v425, %v425
        %v640 = vmul.f32 %v430, %v430
        %v641 = vmul.f32 %v433, %v433
        %v642 = vmul.f32 %v438, %v438
        %v643 = vmul.f32 %v441, %v441
        %v644 = vmul.f32 %v446, %v446
        %v645 = vmul.f32 %v449, %v449
        %v646 = vmul.f32 %v454, %v454
        %v647 = vmul.f32 %v457, %v457
        %v648 = vmul.f32 %v462, %v462
        %v649 = vmul.f32 %v465, %v465
        %v650 = vmul.f32 %v470, %v470
        %v651 = vmul.f32 %v473, %v473
        %v652 = vmul.f32 %v478, %v478
        %v653 = vmul.f32 %v481, %v481
        %v654 = vmul.f32 %v486, %v486
        %v655 = vmul.f32 %v489, %v489
        %v656 = vmul.f32 %v494, %v494
        %v657 = vmul.f32 %v497, %v497
        %v658 = vmul.f32 %v502, %v502
        %v659 = vmul.f32 %v505, %v505
        %v660 = vmul.f32 %v510, %v510
        %v661 = vmul.f32 %v513, %v513
        %v662 = vmul.f32 %v518, %v518
        %v663 = vmul.f32 %v521, %v521
        %v664 = vmul.f32 %v526, %v526
        %v665 = vmul.f32 %v529, %v529
        %v666 = vsel %vm532, %v634, 0.0
        %v667 = vsel %vm532, %v635, 0.0
        %v668 = vadd.f32 %v666, %v667
        %v669 = vsel %vm532, %v636, 0.0
        %v670 = vadd.f32 %v668, %v669
        %v671 = vsel %vm532, %v637, 0.0
        %v672 = vadd.f32 %v670, %v671
        %v673 = vsel %vm532, %v638, 0.0
        %v674 = vadd.f32 %v672, %v673
        %v675 = vsel %vm532, %v639, 0.0
        %v676 = vadd.f32 %v674, %v675
        %v677 = vsel %vm532, %v640, 0.0
        %v678 = vadd.f32 %v676, %v677
        %v679 = vsel %vm532, %v641, 0.0
        %v680 = vadd.f32 %v678, %v679
        %v681 = vsel %vm532, %v642, 0.0
        %v682 = vadd.f32 %v680, %v681
        %v683 = vsel %vm532, %v643, 0.0
        %v684 = vadd.f32 %v682, %v683
        %v685 = vsel %vm532, %v644, 0.0
        %v686 = vadd.f32 %v684, %v685
        %v687 = vsel %vm532, %v645, 0.0
        %v688 = vadd.f32 %v686, %v687
        %v689 = vsel %vm532, %v646, 0.0
        %v690 = vadd.f32 %v688, %v689
        %v691 = vsel %vm532, %v647, 0.0
        %v692 = vadd.f32 %v690, %v691
        %v693 = vsel %vm532, %v648, 0.0
        %v694 = vadd.f32 %v692, %v693
        %v695 = vsel %vm532, %v649, 0.0
        %v696 = vadd.f32 %v694, %v695
        %v697 = vsel %vm532, %v650, 0.0
        %v698 = vadd.f32 %v696, %v697
        %v699 = vsel %vm532, %v651, 0.0
        %v700 = vadd.f32 %v698, %v699
        %v701 = vsel %vm532, %v652, 0.0
        %v702 = vadd.f32 %v700, %v701
        %v703 = vsel %vm532, %v653, 0.0
        %v704 = vadd.f32 %v702, %v703
        %v705 = vsel %vm532, %v654, 0.0
        %v706 = vadd.f32 %v704, %v705
        %v707 = vsel %vm532, %v655, 0.0
        %v708 = vadd.f32 %v706, %v707
        %v709 = vsel %vm532, %v656, 0.0
        %v710 = vadd.f32 %v708, %v709
        %v711 = vsel %vm532, %v657, 0.0
        %v712 = vadd.f32 %v710, %v711
        %v713 = vsel %vm532, %v658, 0.0
        %v714 = vadd.f32 %v712, %v713
        %v715 = vsel %vm532, %v659, 0.0
        %v716 = vadd.f32 %v714, %v715
        %v717 = vsel %vm532, %v660, 0.0
        %v718 = vadd.f32 %v716, %v717
        %v719 = vsel %vm532, %v661, 0.0
        %v720 = vadd.f32 %v718, %v719
        %v721 = vsel %vm532, %v662, 0.0
        %v722 = vadd.f32 %v720, %v721
        %v723 = vsel %vm532, %v663, 0.0
        %v724 = vadd.f32 %v722, %v723
        %v725 = vsel %vm532, %v664, 0.0
        %v726 = vadd.f32 %v724, %v725
        %v727 = vsel %vm532, %v665, 0.0
        %v728 = vadd.f32 %v726, %v727
        %v729 = vrot.slane %v728, 4
        %v730 = vadd.f32 %v728, %v729
        %v731 = vrot.slane %v730, 2
        %v732 = vadd.f32 %v730, %v731
        %v733 = vrot.slane %v732, 1
        %v734 = vadd.f32 %v732, %v733
        %vm735 = vcmask 1040384
        %v736 = vsel %vm735, %v633, %v734
        %vm737 = vcmask 25600
        %738 = vst.msk [vmem:[%s172] sm:$0x3] %vm737, %v736
        %s739 = smul.u32 32, %s18
        %p740 = scmp.lt.s32.totalorder %s739, 63
        %s741 = scalar_select %p740, %s739, 63
        %s742 = smul.addr %s741, 8
        %s743 = scalar_lea.vmem %s2, %s742
        %s744 = sand.u32 %s99, 1
        %s745 = scalar_lea.sflag [#allocation3], %s744
        %s746 = sand.u32 %s99, 1
        %s747 = smul.addr %s746, 2
        %s748 = scalar_lea.vmem [#allocation2], %s747
        // Predicated region
        $region29: #{tpu_custom_call.1} parent=27 // pred_check
          %p749 = pneg %p83
        $region30: #{tpu_custom_call.1} parent=27 // pred_check_branch
          %751 = sbr.rel (%p749) target = $region32
        $region31: #{tpu_custom_call.1} parent=27 // pred_region
          %s752 = smul.u32 32, %s18
        $region32: #{tpu_custom_call.1} parent=27 // pred_fallthru
          _
        // Predicated region
        $region33: #{tpu_custom_call.1} parent=27 // pred_check
          %p753 = pneg %p109
        $region34: #{tpu_custom_call.1} parent=27 // pred_check_branch
          %755 = sbr.rel (%p753) target = $region36
        $region35: #{tpu_custom_call.1} parent=27 // pred_region
          %s757 = ssub.s32 32, 32
          %758 = vsyncadd %s745, %s757
          %s759 = smul.addr %s18, 32
          %s760 = scalar_lea.hbm %s3, %s759
          %s762 = sshll.u32 %s748, 4
          %s763 = int_to_ptr.vmem [resolvable:$true] %s762
          %765 = dma.vmem_to_hbm [thread:$0]  %s763, 32, %s760, %s745
        $region36: #{tpu_custom_call.1} parent=27 // pred_fallthru
          _
      $region28: #{tpu_custom_call.1} parent=5 // pred_fallthru
        _
      %p766 = scmp.le.s32.totalorder 2, %s13
      // Predicated region
      $region37: #{tpu_custom_call.1} parent=5 // pred_check
        %p767 = pneg %p766
      $region38: #{tpu_custom_call.1} parent=5 // pred_check_branch
        %769 = sbr.rel (%p767) target = $region40
      $region39: #{tpu_custom_call.1} parent=5 // pred_region
        %s770 = ssub.s32 %s13, 2
        // Predicated region
        $region41: #{tpu_custom_call.1} parent=39 // pred_check
          %p771 = pneg %p89
        $region42: #{tpu_custom_call.1} parent=39 // pred_check_branch
          %773 = sbr.rel (%p771) target = $region44
        $region43: #{tpu_custom_call.1} parent=39 // pred_region
          %s774 = smul.u32 32, %s19
          %p775 = scmp.lt.s32.totalorder %s774, 63
          %s776 = scalar_select %p775, %s774, 63
          %s777 = smul.addr %s776, 8
          %s778 = scalar_lea.vmem %s2, %s777
        $region44: #{tpu_custom_call.1} parent=39 // pred_fallthru
          _
        // Predicated region
        $region45: #{tpu_custom_call.1} parent=39 // pred_check
          %p779 = pneg %p115
        $region46: #{tpu_custom_call.1} parent=39 // pred_check_branch
          %781 = sbr.rel (%p779) target = $region48
        $region47: #{tpu_custom_call.1} parent=39 // pred_region
          %s782 = sand.u32 %s100, 1
          %s783 = scalar_lea.sflag [#allocation3], %s782
          %s784 = sand.u32 %s100, 1
          %s785 = smul.addr %s784, 2
          %s786 = scalar_lea.vmem [#allocation2], %s785
          %787 = dma.done %s783, 32
        $region48: #{tpu_custom_call.1} parent=39 // pred_fallthru
          _
      $region40: #{tpu_custom_call.1} parent=5 // pred_fallthru
        _
    $region6: #{tpu_custom_call.1} parent=1 // loop_footer
      %s17 = sadd.s32 1, %s13
    $region7: #{tpu_custom_call.1} parent=1 // loop_footer_branch
      %12 = sbr.rel target = $region3
    $region8: #{tpu_custom_call.1} parent=1 // loop_exit
      _
    %788 = vsyncpa [#allocation3], 1
    %s789 = scalar_lea.sflag [#allocation3], 1
    %790 = vsyncpa %s789, 1

</llo_original>
